<compile_context>
chip_gen: v6e
topology: v6e:2x2x1
jax: 0.10.0
libtpu: 0.0.40
codegen_flags: <defaults>
</compile_context>

<pallas_src>
import functools

import jax
import jax.numpy as jnp
from jax.experimental import pallas as pl
from jax.experimental.pallas import tpu as pltpu

LANE = 128


def _round_up(x, m):
    return (x + m - 1) // m * m


# ----------------------------- kernels -----------------------------

def _sage_conv_kernel(a_ref, x_ref, wcat_ref, b_ref, h_ref):
    """relu(SAGEConv(x)) for one row-block of nodes.

    a_ref    : [TILE_N, Np]  bf16  streamed row block of normalized adjacency
    x_ref    : [Np, Fp]      bf16  all node features (grid-invariant, resident)
    wcat_ref : [2*Fp, Hp]    bf16  concat([W_l^T ; W_r^T]) pre-transposed/padded
    b_ref    : [1, Hp]       f32   lin_l bias
    h_ref    : [TILE_N, Hp]  bf16  output activations for this row block
    """
    i = pl.program_id(0)
    tile_n = a_ref.shape[0]

    # mean aggregation over neighbors: A_tile @ X  (bf16 MXU, f32 accumulate)
    agg = jnp.dot(a_ref[...], x_ref[...], preferred_element_type=jnp.float32)

    # self features of this row block, sliced from the resident full X
    row0 = pl.multiple_of(i * tile_n, tile_n)
    x_self = x_ref[pl.ds(row0, tile_n), :]

    # fused [agg | x_self] @ [W_l^T ; W_r^T]  (doubles MXU contraction width)
    cat = jnp.concatenate([agg.astype(jnp.bfloat16), x_self], axis=-1)
    h = jnp.dot(cat, wcat_ref[...], preferred_element_type=jnp.float32) + b_ref[...]
    h_ref[...] = jnp.maximum(h, 0.0).astype(h_ref.dtype)


def _sage_head_kernel(a_ref, h_ref, wcat2_ref, bl2_ref, w1t_ref, b1_ref,
                      w2t_ref, b2_ref, out_ref, *, num_classes):
    """relu(conv2(h1)) -> relu(lin1) -> dropout(eval: id) -> lin2 -> log_softmax."""
    i = pl.program_id(0)
    tile_n = a_ref.shape[0]

    agg = jnp.dot(a_ref[...], h_ref[...], preferred_element_type=jnp.float32)
    row0 = pl.multiple_of(i * tile_n, tile_n)
    h_self = h_ref[pl.ds(row0, tile_n), :]

    cat = jnp.concatenate([agg.astype(jnp.bfloat16), h_self], axis=-1)
    h2 = jnp.dot(cat, wcat2_ref[...], preferred_element_type=jnp.float32) + bl2_ref[...]
    h2 = jnp.maximum(h2, 0.0)

    z = jnp.dot(h2.astype(jnp.bfloat16), w1t_ref[...],
                preferred_element_type=jnp.float32) + b1_ref[...]
    z = jnp.maximum(z, 0.0)
    # dropout: inference / eval mode => identity
    # TODO(synk): training-mode dropout (pltpu.prng_random_bits mask) not emitted here.

    logits = jnp.dot(z.astype(jnp.bfloat16), w2t_ref[...],
                     preferred_element_type=jnp.float32) + b2_ref[...]

    # mask the zero-padded class lanes so they don't perturb log_softmax
    lane = jax.lax.broadcasted_iota(jnp.int32, logits.shape, 1)
    logits = jnp.where(lane < num_classes, logits, jnp.full_like(logits, -1e30))

    m = jnp.max(logits, axis=-1, keepdims=True)
    s = logits - m
    lse = jnp.log(jnp.sum(jnp.exp(s), axis=-1, keepdims=True))
    out_ref[...] = s - lse


# ----------------------------- wrapper -----------------------------

def _pad2(w, rows, cols, dtype=None):
    dtype = w.dtype if dtype is None else dtype
    out = jnp.zeros((rows, cols), dtype)
    return out.at[: w.shape[0], : w.shape[1]].set(w.astype(dtype))


def build_normalized_adjacency(edge_index, num_nodes):
    """edge_index: [2, E] int32 (row 0 = source j, row 1 = target i).
    Returns A[i, j] = 1 / in_deg(i) for each edge j->i (mean aggregation)."""
    src, dst = edge_index[0], edge_index[1]
    adj = jnp.zeros((num_nodes, num_nodes), jnp.float32).at[dst, src].add(1.0)
    deg = jnp.sum(adj, axis=1, keepdims=True)
    return adj / jnp.maximum(deg, 1.0)


def graphsage_forward(x, edge_index, params, *, tile_n=128):
    """x: [N, F_in] f32; edge_index: [2, E] int32; params: PyTorch-layout weights."""
    N, F_in = x.shape
    H = params["wl1"].shape[0]
    C = params["w2"].shape[0]

    Fp = _round_up(F_in, LANE)
    Hp = _round_up(H, LANE)
    Cp = _round_up(C, LANE)
    Np = _round_up(N, LANE)          # lane-dense adjacency columns / node rows
    if tile_n % 8 != 0 or Np % tile_n != 0:
        tile_n = LANE                # LANE always divides Np and satisfies (8,128)
    grid = (Np // tile_n,)

    # dense row-normalized adjacency (mean aggregation), zero-padded, bf16
    a = build_normalized_adjacency(edge_index, N)
    a_p = _pad2(a, Np, Np, jnp.bfloat16)
    x_p = _pad2(x, Np, Fp, jnp.bfloat16)

    # pre-transposed / zero-padded / fused weights (free layout plumbing in XLA)
    wcat1 = jnp.concatenate(
        [_pad2(params["wl1"].T, Fp, Hp), _pad2(params["wr1"].T, Fp, Hp)],
        axis=0).astype(jnp.bfloat16)                       # [2*Fp, Hp]
    bl1 = _pad2(params["bl1"], 1, Hp, jnp.float32)
    wcat2 = jnp.concatenate(
        [_pad2(params["wl2"].T, Hp, Hp), _pad2(params["wr2"].T, Hp, Hp)],
        axis=0).astype(jnp.bfloat16)                       # [2*Hp, Hp]
    bl2 = _pad2(params["bl2"], 1, Hp, jnp.float32)
    w1_t = _pad2(params["w1"].T, Hp, Hp, jnp.bfloat16)
    b1 = _pad2(params["b1"], 1, Hp, jnp.float32)
    w2_t = _pad2(params["w2"].T, Hp, Cp, jnp.bfloat16)
    b2 = _pad2(params["b2"], 1, Cp, jnp.float32)

    cparams = pltpu.CompilerParams(dimension_semantics=("parallel",))
    inv = lambda i: (0, 0)       # grid-invariant (VMEM-resident) blocks
    rowblk = lambda i: (i, 0)    # streamed row blocks

    # -------- layer 1: h1 = relu(conv1(x)) --------
    cost1 = pl.CostEstimate(
        flops=2 * Np * Np * Fp + 2 * Np * 2 * Fp * Hp,
        transcendentals=0,
        bytes_accessed=2 * (Np * Np + Np * Fp + 2 * Fp * Hp + Np * Hp) + 4 * Hp)
    h1 = pl.pallas_call(
        _sage_conv_kernel,
        out_shape=jax.ShapeDtypeStruct((Np, Hp), jnp.bfloat16),
        grid_spec=pltpu.PrefetchScalarGridSpec(
            num_scalar_prefetch=0,
            grid=grid,
            in_specs=[
                pl.BlockSpec((tile_n, Np), rowblk),     # A row block (streamed)
                pl.BlockSpec((Np, Fp), inv),            # X (resident)
                pl.BlockSpec((2 * Fp, Hp), inv),        # fused conv1 weight
                pl.BlockSpec((1, Hp), inv),             # conv1 bias
            ],
            out_specs=pl.BlockSpec((tile_n, Hp), rowblk),
        ),
        compiler_params=cparams,
        cost_estimate=cost1,
    )(a_p, x_p, wcat1, bl1)

    # -------- layer 2 + MLP head + log_softmax --------
    cost2 = pl.CostEstimate(
        flops=(2 * Np * Np * Hp + 2 * Np * 2 * Hp * Hp
               + 2 * Np * Hp * Hp + 2 * Np * Hp * Cp),
        transcendentals=Np * Cp + Np,
        bytes_accessed=(2 * (Np * Np + Np * Hp + 2 * Hp * Hp + Hp * Hp + Hp * Cp)
                        + 4 * (2 * Hp + Cp + Np * Cp)))
    out_p = pl.pallas_call(
        functools.partial(_sage_head_kernel, num_classes=C),
        out_shape=jax.ShapeDtypeStruct((Np, Cp), jnp.float32),
        grid_spec=pltpu.PrefetchScalarGridSpec(
            num_scalar_prefetch=0,
            grid=grid,
            in_specs=[
                pl.BlockSpec((tile_n, Np), rowblk),     # A row block (streamed)
                pl.BlockSpec((Np, Hp), inv),            # h1 (resident)
                pl.BlockSpec((2 * Hp, Hp), inv),        # fused conv2 weight
                pl.BlockSpec((1, Hp), inv),             # conv2 bias
                pl.BlockSpec((Hp, Hp), inv),            # lin1 weight (pre-T)
                pl.BlockSpec((1, Hp), inv),             # lin1 bias
                pl.BlockSpec((Hp, Cp), inv),            # lin2 weight (pre-T)
                pl.BlockSpec((1, Cp), inv),             # lin2 bias
            ],
            out_specs=pl.BlockSpec((tile_n, Cp), rowblk),
        ),
        compiler_params=cparams,
        cost_estimate=cost2,
    )(a_p, h1, wcat2, bl2, w1_t, b1, w2_t, b2)

    return out_p[:N, :C]


def init_params(key, input_channels, hidden_channels, output_channels):
    ks = jax.random.split(key, 8)

    def glorot(k, shape):
        fan_in, fan_out = shape[1], shape[0]
        lim = jnp.sqrt(6.0 / (fan_in + fan_out))
        return jax.random.uniform(k, shape, jnp.float32, -lim, lim)

    H, F, C = hidden_channels, input_channels, output_channels
    return {
        # SAGEConv1: lin_l (with bias) on aggregated neighbors, lin_r (no bias) on self
        "wl1": glorot(ks[0], (H, F)), "wr1": glorot(ks[1], (H, F)),
        "bl1": jnp.zeros((1, H), jnp.float32),
        # SAGEConv2
        "wl2": glorot(ks[2], (H, H)), "wr2": glorot(ks[3], (H, H)),
        "bl2": jnp.zeros((1, H), jnp.float32),
        # lin1, lin2
        "w1": glorot(ks[4], (H, H)), "b1": 0.01 * jnp.ones((1, H), jnp.float32),
        "w2": glorot(ks[5], (C, H)), "b2": 0.01 * jnp.ones((1, C), jnp.float32),
    }


if __name__ == "__main__":
    key = jax.random.PRNGKey(0)
    N, F_IN, HIDDEN, CLASSES, E = 64, 16, 32, 8, 256

    k_x, k_e, k_p = jax.random.split(key, 3)
    x = jax.random.normal(k_x, (N, F_IN), jnp.float32)
    edge_index = jax.random.randint(k_e, (2, E), 0, N, jnp.int32)
    params = init_params(k_p, F_IN, HIDDEN, CLASSES)

    # tile_n=64 -> padded N=128, 2 grid steps: exercises the row-block pipeline.
    out = graphsage_forward(x, edge_index, params, tile_n=64)
    out = jax.block_until_ready(out)

    assert out.shape == (N, CLASSES)
    # log_softmax rows must (approximately) exponentiate-sum to 1
    row_sums = jnp.sum(jnp.exp(out), axis=-1)
    assert jnp.allclose(row_sums, 1.0, atol=1e-4)
    print("KERNEL_OK")
</pallas_src>

<mosaic_0001>
module attributes {stable_mosaic.version = 11 : i64} {
  func.func @_sage_conv_kernel(%arg0: i32, %arg1: memref<64x128xbf16, #tpu.memory_space<vmem>>, %arg2: memref<128x128xbf16, #tpu.memory_space<vmem>>, %arg3: memref<256x128xbf16, #tpu.memory_space<vmem>>, %arg4: memref<1x128xf32, #tpu.memory_space<vmem>>, %arg5: memref<64x128xbf16, #tpu.memory_space<vmem>>) attributes {dimension_semantics = [#tpu.dimension_semantics<parallel>], iteration_bounds = array<i64: 2>, scalar_prefetch = 0 : i64, scratch_operands = 0 : i64, tpu.core_type = #tpu.core_type<tc>, window_params = [{transform_indices = @transform_0, window_bounds = array<i64: 64, 128>}, {pipeline_mode = #tpu.pipeline_mode<synchronous>, transform_indices = @transform_1, window_bounds = array<i64: 128, 128>}, {pipeline_mode = #tpu.pipeline_mode<synchronous>, transform_indices = @transform_2, window_bounds = array<i64: 256, 128>}, {pipeline_mode = #tpu.pipeline_mode<synchronous>, transform_indices = @transform_3, window_bounds = array<i64: 1, 128>}, {transform_indices = @transform_4, window_bounds = array<i64: 64, 128>}]} {
    %c0 = arith.constant 0 : index
    %c0_0 = arith.constant 0 : index
    %0 = vector.load %arg1[%c0, %c0_0] : memref<64x128xbf16, #tpu.memory_space<vmem>>, vector<64x128xbf16>
    %c0_1 = arith.constant 0 : index
    %c0_2 = arith.constant 0 : index
    %1 = vector.load %arg2[%c0_1, %c0_2] : memref<128x128xbf16, #tpu.memory_space<vmem>>, vector<128x128xbf16>
    %cst = arith.constant dense<0.000000e+00> : vector<64x128xf32>
    %2 = tpu.matmul %0, %1, %cst {dimension_numbers = #tpu.dot_dimension_numbers<[1], [0], [0], [1], [0, 0, 1, 1], [], []>} : vector<64x128xbf16>, vector<128x128xbf16>, vector<64x128xf32> -> vector<64x128xf32>
    %c64_i32 = arith.constant 64 : i32
    %3 = arith.muli %arg0, %c64_i32 : i32
    %4 = tpu.assume_multiple %3, 64 : i32
    %5 = arith.index_cast %4 : i32 to index
    %c0_3 = arith.constant 0 : index
    %6 = vector.load %arg2[%5, %c0_3] : memref<128x128xbf16, #tpu.memory_space<vmem>>, vector<64x128xbf16>
    %7 = arith.truncf %2 : vector<64x128xf32> to vector<64x128xbf16>
    %8 = tpu.concatenate %7, %6 in 1 : vector<64x128xbf16>, vector<64x128xbf16> -> vector<64x256xbf16>
    %c0_4 = arith.constant 0 : index
    %c0_5 = arith.constant 0 : index
    %9 = vector.load %arg3[%c0_4, %c0_5] : memref<256x128xbf16, #tpu.memory_space<vmem>>, vector<256x128xbf16>
    %cst_6 = arith.constant dense<0.000000e+00> : vector<64x128xf32>
    %10 = tpu.matmul %8, %9, %cst_6 {dimension_numbers = #tpu.dot_dimension_numbers<[1], [0], [0], [1], [0, 0, 1, 1], [], []>} : vector<64x256xbf16>, vector<256x128xbf16>, vector<64x128xf32> -> vector<64x128xf32>
    %c0_7 = arith.constant 0 : index
    %c0_8 = arith.constant 0 : index
    %11 = vector.load %arg4[%c0_7, %c0_8] : memref<1x128xf32, #tpu.memory_space<vmem>>, vector<1x128xf32>
    %12 = vector.broadcast %11 : vector<1x128xf32> to vector<64x128xf32>
    %13 = arith.addf %10, %12 : vector<64x128xf32>
    %cst_9 = arith.constant 0.000000e+00 : f32
    %14 = vector.broadcast %cst_9 : f32 to vector<64x128xf32>
    %15 = arith.maximumf %13, %14 : vector<64x128xf32>
    %16 = arith.truncf %15 : vector<64x128xf32> to vector<64x128xbf16>
    %c0_10 = arith.constant 0 : index
    %c0_11 = arith.constant 0 : index
    %17 = vector.load %arg5[%c0_10, %c0_11] : memref<64x128xbf16, #tpu.memory_space<vmem>>, vector<64x128xbf16>
    tpu.vector_store %arg5[%c0_10, %c0_11], %16 {strides = array<i32>} : memref<64x128xbf16, #tpu.memory_space<vmem>>, vector<64x128xbf16>,
    return
  }
  func.func @transform_0(%arg0: i32) -> (i32, i32) {
    %c0_i32 = arith.constant 0 : i32
    %c0_i32_0 = arith.constant 0 : i32
    return %arg0, %c0_i32 : i32, i32
  }
  func.func @transform_1(%arg0: i32) -> (i32, i32) {
    %c0_i32 = arith.constant 0 : i32
    %c0_i32_0 = arith.constant 0 : i32
    %c0_i32_1 = arith.constant 0 : i32
    return %c0_i32, %c0_i32_0 : i32, i32
  }
  func.func @transform_2(%arg0: i32) -> (i32, i32) {
    %c0_i32 = arith.constant 0 : i32
    %c0_i32_0 = arith.constant 0 : i32
    %c0_i32_1 = arith.constant 0 : i32
    return %c0_i32, %c0_i32_0 : i32, i32
  }
  func.func @transform_3(%arg0: i32) -> (i32, i32) {
    %c0_i32 = arith.constant 0 : i32
    %c0_i32_0 = arith.constant 0 : i32
    %c0_i32_1 = arith.constant 0 : i32
    return %c0_i32, %c0_i32_0 : i32, i32
  }
  func.func @transform_4(%arg0: i32) -> (i32, i32) {
    %c0_i32 = arith.constant 0 : i32
    %c0_i32_0 = arith.constant 0 : i32
    return %arg0, %c0_i32 : i32, i32
  }
}

</mosaic_0001>

<llo_original>
// kernel: tpu_custom_call.1
$region0: #{tpu_custom_call.1}
  #allocation0 [shape = 'u32[]', space=smem, size = 0x4, offset = 0x4, fixed_abs, tag = 'smem constant byte address 0x4 - core index']
  #allocation1 [shape = 'u32[144,128]{1,0:T(1,128)}', space=vmem, size = 0x12000, scoped, tag = 'internal scratch']
  %s0 = inlined_call_operand.hbm [shape: bf16[128,128], index: 0, kind: input, shape index: {}]
  %s1 = inlined_call_operand.hbm [shape: bf16[128,128], index: 1, kind: input, shape index: {}]
  %s2 = inlined_call_operand.hbm [shape: bf16[256,128], index: 2, kind: input, shape index: {}]
  %s3 = inlined_call_operand.vmem [shape: f32[1,128], index: 3, kind: input, shape index: {}]
  %s4 = inlined_call_operand.hbm [shape: bf16[128,128], index: 4, kind: output, shape index: {}]
  %s5 = sld [smem:[#allocation0]]
  $region61: #{tpu_custom_call.1} parent=0
    _
  %s7 = ssub.s32 1, %s5
  %s8 = scalar_select 0, %s7, %s5
  $region1: #{tpu_custom_call.1} parent=0
    #allocation2 [shape = 'u8[32768]{0}', space=vmem, size = 0x8000, scoped, tag = 'input window, operand 0']
    #allocation3 [shape = 's32[2]{0}', space=sflag, size = 0x8, scoped, tag = 'scoped memory for tpu_custom_call.1']
    #allocation4 [shape = 's32[2]{0}', space=sflag, size = 0x8, scoped, tag = 'scoped memory for tpu_custom_call.1']
    #allocation5 [shape = 'u8[32768]{0}', space=vmem, size = 0x8000, scoped, tag = 'input window, operand 1, single buffered']
    #allocation6 [shape = 's32[1]{0}', space=sflag, size = 0x4, scoped, tag = 'scoped memory for tpu_custom_call.1']
    #allocation7 [shape = 'u8[65536]{0}', space=vmem, size = 0x10000, scoped, tag = 'input window, operand 2, single buffered']
    #allocation8 [shape = 'u8[32768]{0}', space=vmem, size = 0x8000, scoped, tag = 'output window, operand 0']
    %9 = vsyncpa [#allocation3], 0
    %s10 = scalar_lea.sflag [#allocation3], 1
    %11 = vsyncpa %s10, 0
    %12 = vsyncpa [#allocation6], 0
    %13 = vsyncpa [#allocation4], 0
    %s14 = scalar_lea.sflag [#allocation4], 1
    %15 = vsyncpa %s14, 0
    loop: start=0, step=1, limit=4
    $region2: #{tpu_custom_call.1} parent=1 // loop_pre_header
      _
    $region3: #{tpu_custom_call.1} parent=1 // loop_header
      %s17 = sphi 0, %s21
      %p18 = scmp.ge.s32.totalorder %s17, 4
      %s27 = sphi 0, %s29
      %s30 = sphi 0, %s27
      %s31 = sphi 0, %s30
      %s47 = sphi 0, %s31
      %s51 = sphi 0, %s51
      %s53 = sphi 0, %s51
      %s54 = sphi 0, %s53
      %s68 = sphi 0, %s54
      %s72 = sphi 0, %s72
      %s74 = sphi 0, %s72
      %s75 = sphi 0, %s74
      %s89 = sphi 0, %s75
      %s93 = sphi 0, %s93
      %s95 = sphi 0, %s93
      %s96 = sphi 0, %s95
      %s110 = sphi 0, %s96
      %s116 = sphi 0, %s118
      %s119 = sphi 0, %s116
      %s120 = sphi 0, %s119
      %s136 = sphi 0, %s120
    $region4: #{tpu_custom_call.1} parent=1 // loop_header_branch
      %20 = sbr.rel (%p18) target = $region8
    $region5: #{tpu_custom_call.1} parent=1 // loop_body
      %s22 = ssub.s32 %s17, 1
      %s23 = ssub.s32 %s17, 2
      %s24 = sadd.s32 %s17, 1
      %s25 = ssub.s32 %s17, %s24
      %p26 = scmp.eq.s32.totalorder %s25, 0
      %s28 = sadd.s32 %s27, 1
      %s29 = scalar_select %p26, %s27, %s28
      %p32 = pneg %p26
      %p33 = scmp.eq.s32.totalorder %s17, 1
      %p34 = por %p32, %p33
      %p35 = scmp.ne.s32.totalorder %s27, %s30
      %p36 = scmp.eq.s32.totalorder %s17, 0
      %p37 = por %p35, %p36
      %p38 = scmp.ne.s32.totalorder %s27, %s30
      %p39 = scmp.eq.s32.totalorder %s22, 1
      %p40 = por %p38, %p39
      %p41 = scmp.ne.s32.totalorder %s30, %s31
      %p42 = scmp.eq.s32.totalorder %s22, 0
      %p43 = por %p41, %p42
      %p44 = scmp.ne.s32.totalorder %s30, %s31
      %p45 = scmp.eq.s32.totalorder %s23, 1
      %p46 = por %p44, %p45
      %p48 = scmp.ne.s32.totalorder %s31, %s47
      %p49 = scmp.eq.s32.totalorder %s23, 0
      %p50 = por %p48, %p49
      %s52 = sadd.s32 %s51, 1
      %p55 = scmp.eq.s32.totalorder %s17, 1
      %p56 = scmp.ne.s32.totalorder %s51, %s53
      %p57 = scmp.eq.s32.totalorder %s17, 0
      %p58 = por %p56, %p57
      %p59 = scmp.ne.s32.totalorder %s51, %s53
      %p60 = scmp.eq.s32.totalorder %s22, 1
      %p61 = por %p59, %p60
      %p62 = scmp.ne.s32.totalorder %s53, %s54
      %p63 = scmp.eq.s32.totalorder %s22, 0
      %p64 = por %p62, %p63
      %p65 = scmp.ne.s32.totalorder %s53, %s54
      %p66 = scmp.eq.s32.totalorder %s23, 1
      %p67 = por %p65, %p66
      %p69 = scmp.ne.s32.totalorder %s54, %s68
      %p70 = scmp.eq.s32.totalorder %s23, 0
      %p71 = por %p69, %p70
      %s73 = sadd.s32 %s72, 1
      %p76 = scmp.eq.s32.totalorder %s17, 1
      %p77 = scmp.ne.s32.totalorder %s72, %s74
      %p78 = scmp.eq.s32.totalorder %s17, 0
      %p79 = por %p77, %p78
      %p80 = scmp.ne.s32.totalorder %s72, %s74
      %p81 = scmp.eq.s32.totalorder %s22, 1
      %p82 = por %p80, %p81
      %p83 = scmp.ne.s32.totalorder %s74, %s75
      %p84 = scmp.eq.s32.totalorder %s22, 0
      %p85 = por %p83, %p84
      %p86 = scmp.ne.s32.totalorder %s74, %s75
      %p87 = scmp.eq.s32.totalorder %s23, 1
      %p88 = por %p86, %p87
      %p90 = scmp.ne.s32.totalorder %s75, %s89
      %p91 = scmp.eq.s32.totalorder %s23, 0
      %p92 = por %p90, %p91
      %s94 = sadd.s32 %s93, 1
      %p97 = scmp.eq.s32.totalorder %s17, 1
      %p98 = scmp.ne.s32.totalorder %s93, %s95
      %p99 = scmp.eq.s32.totalorder %s17, 0
      %p100 = por %p98, %p99
      %p101 = scmp.ne.s32.totalorder %s93, %s95
      %p102 = scmp.eq.s32.totalorder %s22, 1
      %p103 = por %p101, %p102
      %p104 = scmp.ne.s32.totalorder %s95, %s96
      %p105 = scmp.eq.s32.totalorder %s22, 0
      %p106 = por %p104, %p105
      %p107 = scmp.ne.s32.totalorder %s95, %s96
      %p108 = scmp.eq.s32.totalorder %s23, 1
      %p109 = por %p107, %p108
      %p111 = scmp.ne.s32.totalorder %s96, %s110
      %p112 = scmp.eq.s32.totalorder %s23, 0
      %p113 = por %p111, %p112
      %s114 = ssub.s32 %s17, %s24
      %p115 = scmp.eq.s32.totalorder %s114, 0
      %s117 = sadd.s32 %s116, 1
      %s118 = scalar_select %p115, %s116, %s117
      %p121 = pneg %p115
      %p122 = scmp.eq.s32.totalorder %s17, 1
      %p123 = por %p121, %p122
      %p124 = scmp.ne.s32.totalorder %s116, %s119
      %p125 = scmp.eq.s32.totalorder %s17, 0
      %p126 = por %p124, %p125
      %p127 = scmp.ne.s32.totalorder %s116, %s119
      %p128 = scmp.eq.s32.totalorder %s22, 1
      %p129 = por %p127, %p128
      %p130 = scmp.ne.s32.totalorder %s119, %s120
      %p131 = scmp.eq.s32.totalorder %s22, 0
      %p132 = por %p130, %p131
      %p133 = scmp.ne.s32.totalorder %s119, %s120
      %p134 = scmp.eq.s32.totalorder %s23, 1
      %p135 = por %p133, %p134
      %p137 = scmp.ne.s32.totalorder %s120, %s136
      %p138 = scmp.eq.s32.totalorder %s23, 0
      %p139 = por %p137, %p138
      %p140 = scmp.le.s32.totalorder 1, %s17
      %p141 = scmp.lt.s32.totalorder %s17, 3
      %p142 = pnand %p140, %p141
      %p143 = pneg %p142
      // Predicated region
      $region9: #{tpu_custom_call.1} parent=5 // pred_check
        _
      $region10: #{tpu_custom_call.1} parent=5 // pred_check_branch
        %145 = sbr.rel (%p142) target = $region12
      $region11: #{tpu_custom_call.1} parent=5 // pred_region
        %s146 = ssub.s32 %s17, 1
        // Predicated region
        $region13: #{tpu_custom_call.1} parent=11 // pred_check
          %p147 = pneg %p64
        $region14: #{tpu_custom_call.1} parent=11 // pred_check_branch
          %149 = sbr.rel (%p147) target = $region16
        $region15: #{tpu_custom_call.1} parent=11 // pred_region
          %s151 = ssub.s32 1024, 1024
          %152 = vsyncadd [#allocation6], %s151
          %s153 = sshll.u32 [#allocation5], 4
          %s154 = int_to_ptr.vmem [resolvable:$true] %s153
          %159 = dma.hbm_to_vmem [thread:$0]  %s1, 1024, %s154, [#allocation6], 64, 64, 4
        $region16: #{tpu_custom_call.1} parent=11 // pred_fallthru
          _
        // Predicated region
        $region17: #{tpu_custom_call.1} parent=11 // pred_check
          %p160 = pneg %p85
        $region18: #{tpu_custom_call.1} parent=11 // pred_check_branch
          %162 = sbr.rel (%p160) target = $region20
        $region19: #{tpu_custom_call.1} parent=11 // pred_region
          %s164 = ssub.s32 2048, 2048
          %165 = vsyncadd [#allocation6], %s164
          %s166 = sshll.u32 [#allocation7], 4
          %s167 = int_to_ptr.vmem [resolvable:$true] %s166
          %172 = dma.hbm_to_vmem [thread:$0]  %s2, 2048, %s167, [#allocation6], 64, 64, 4
        $region20: #{tpu_custom_call.1} parent=11 // pred_fallthru
          _
        // Predicated region
        $region21: #{tpu_custom_call.1} parent=11 // pred_check
          %p173 = pneg %p106
        $region22: #{tpu_custom_call.1} parent=11 // pred_check_branch
          %175 = sbr.rel (%p173) target = $region24
        $region23: #{tpu_custom_call.1} parent=11 // pred_region
          _
        $region24: #{tpu_custom_call.1} parent=11 // pred_fallthru
          _
      $region12: #{tpu_custom_call.1} parent=5 // pred_fallthru
        _
      %p176 = scmp.lt.s32.totalorder %s17, 2
      // Predicated region
      $region25: #{tpu_custom_call.1} parent=5 // pred_check
        %p177 = pneg %p176
      $region26: #{tpu_custom_call.1} parent=5 // pred_check_branch
        %179 = sbr.rel (%p177) target = $region28
      $region27: #{tpu_custom_call.1} parent=5 // pred_region
        // Predicated region
        $region29: #{tpu_custom_call.1} parent=27 // pred_check
          %p180 = pneg %p37
        $region30: #{tpu_custom_call.1} parent=27 // pred_check_branch
          %182 = sbr.rel (%p180) target = $region32
        $region31: #{tpu_custom_call.1} parent=27 // pred_region
          %s183 = sand.u32 %s27, 1
          %s184 = scalar_lea.sflag [#allocation3], %s183
          %s185 = sand.u32 %s27, 1
          %s186 = smul.addr %s185, 32
          %s187 = scalar_lea.vmem [#allocation2], %s186
          %s188 = smul.u32 8, %s17
          %s190 = ssub.s32 512, 512
          %191 = vsyncadd %s184, %s190
          %s192 = smul.addr %s188, 64
          %s193 = scalar_lea.hbm %s0, %s192
          %s194 = sshll.u32 %s187, 4
          %s195 = int_to_ptr.vmem [resolvable:$true] %s194
          %200 = dma.hbm_to_vmem [thread:$0]  %s193, 512, %s195, %s184, 64, 64, 4
        $region32: #{tpu_custom_call.1} parent=27 // pred_fallthru
          _
      $region28: #{tpu_custom_call.1} parent=5 // pred_fallthru
        _
      %p201 = scmp.le.s32.totalorder 1, %s17
      %p202 = scmp.lt.s32.totalorder %s17, 3
      %p203 = pnand %p201, %p202
      %p204 = pneg %p203
      // Predicated region
      $region33: #{tpu_custom_call.1} parent=5 // pred_check
        _
      $region34: #{tpu_custom_call.1} parent=5 // pred_check_branch
        %206 = sbr.rel (%p203) target = $region36
      $region35: #{tpu_custom_call.1} parent=5 // pred_region
        %s207 = ssub.s32 %s17, 1
        %s208 = sand.u32 %s30, 1
        %s209 = scalar_lea.sflag [#allocation3], %s208
        %s210 = sand.u32 %s30, 1
        %s211 = smul.addr %s210, 32
        %s212 = scalar_lea.vmem [#allocation2], %s211
        // Predicated region
        $region37: #{tpu_custom_call.1} parent=35 // pred_check
          %p213 = pneg %p43
        $region38: #{tpu_custom_call.1} parent=35 // pred_check_branch
          %215 = sbr.rel (%p213) target = $region40
        $region39: #{tpu_custom_call.1} parent=35 // pred_region
          %216 = dma.done %s209, 512
        $region40: #{tpu_custom_call.1} parent=35 // pred_fallthru
          _
        // Predicated region
        $region41: #{tpu_custom_call.1} parent=35 // pred_check
          %p217 = pneg %p64
        $region42: #{tpu_custom_call.1} parent=35 // pred_check_branch
          %219 = sbr.rel (%p217) target = $region44
        $region43: #{tpu_custom_call.1} parent=35 // pred_region
          %220 = dma.done [#allocation6], 1024
        $region44: #{tpu_custom_call.1} parent=35 // pred_fallthru
          _
        // Predicated region
        $region45: #{tpu_custom_call.1} parent=35 // pred_check
          %p221 = pneg %p85
        $region46: #{tpu_custom_call.1} parent=35 // pred_check_branch
          %223 = sbr.rel (%p221) target = $region48
        $region47: #{tpu_custom_call.1} parent=35 // pred_region
          %224 = dma.done [#allocation6], 2048
        $region48: #{tpu_custom_call.1} parent=35 // pred_fallthru
          _
        %s225 = sand.u32 %s30, 1
        %s226 = scalar_lea.sflag [#allocation3], %s225
        %s227 = sand.u32 %s30, 1
        %s228 = smul.addr %s227, 32
        %s229 = scalar_lea.vmem [#allocation2], %s228
        %p230 = pneg %p43
        %p231 = pneg %p40
        %p232 = pneg %p64
        %p233 = pneg %p61
        %p234 = pneg %p85
        %p235 = pneg %p82
        %p236 = pneg %p106
        %p237 = pneg %p103
        %p238 = pneg %p132
        %p239 = pneg %p129
        %s240 = sand.u32 %s119, 1
        %s241 = scalar_lea.sflag [#allocation4], %s240
        %s242 = sand.u32 %s119, 1
        %s243 = smul.addr %s242, 32
        %s244 = scalar_lea.vmem [#allocation8], %s243
        %s245 = smul.u32 8, %s22
        %s246 = smul.u32 8, %s22
        %v248 = vld [vmem:[%s212] sm:$0xf]
        %v249 = vld [vmem:[%s212 + $0x4] sm:$0xf]
        %v250 = vld [vmem:[%s212 + $0x8] sm:$0xf]
        %v251 = vld [vmem:[%s212 + $0xc] sm:$0xf]
        %v252 = vld [vmem:[%s212 + $0x10] sm:$0xf]
        %v253 = vld [vmem:[%s212 + $0x14] sm:$0xf]
        %v254 = vld [vmem:[%s212 + $0x18] sm:$0xf]
        %v255 = vld [vmem:[%s212 + $0x1c] sm:$0xf]
        %v256 = vld [vmem:[#allocation5] sm:$0xf]
        %v257 = vld [vmem:[#allocation5 + $0x4] sm:$0xf]
        %v258 = vld [vmem:[#allocation5 + $0x8] sm:$0xf]
        %v259 = vld [vmem:[#allocation5 + $0xc] sm:$0xf]
        %v260 = vld [vmem:[#allocation5 + $0x10] sm:$0xf]
        %v261 = vld [vmem:[#allocation5 + $0x14] sm:$0xf]
        %v262 = vld [vmem:[#allocation5 + $0x18] sm:$0xf]
        %v263 = vld [vmem:[#allocation5 + $0x1c] sm:$0xf]
        %v264 = vld [vmem:[#allocation5 + $0x20] sm:$0xf]
        %v265 = vld [vmem:[#allocation5 + $0x24] sm:$0xf]
        %v266 = vld [vmem:[#allocation5 + $0x28] sm:$0xf]
        %v267 = vld [vmem:[#allocation5 + $0x2c] sm:$0xf]
        %v268 = vld [vmem:[#allocation5 + $0x30] sm:$0xf]
        %v269 = vld [vmem:[#allocation5 + $0x34] sm:$0xf]
        %v270 = vld [vmem:[#allocation5 + $0x38] sm:$0xf]
        %v271 = vld [vmem:[#allocation5 + $0x3c] sm:$0xf]
        %v280 = vunpack.c.l.b16 %v248
        %v281 = vunpack.c.l.b16 %v249
        %v282 = vunpack.c.l.b16 %v250
        %v283 = vunpack.c.l.b16 %v251
        %v284 = vunpack.c.l.b16 %v252
        %v285 = vunpack.c.l.b16 %v253
        %v286 = vunpack.c.l.b16 %v254
        %v287 = vunpack.c.l.b16 %v255
        %v288 = vpack.c.b16 %v281, %v280
        %v289 = vpack.c.b16 %v283, %v282
        %v290 = vpack.c.b16 %v285, %v284
        %v291 = vpack.c.b16 %v287, %v286
        %v312 = vunpack.c.l.b16 %v256
        %v313 = vunpack.c.l.b16 %v257
        %v314 = vunpack.c.l.b16 %v258
        %v315 = vunpack.c.l.b16 %v259
        %v316 = vunpack.c.l.b16 %v260
        %v317 = vunpack.c.l.b16 %v261
        %v318 = vunpack.c.l.b16 %v262
        %v319 = vunpack.c.l.b16 %v263
        %v320 = vunpack.c.l.b16 %v264
        %v321 = vunpack.c.l.b16 %v265
        %v322 = vunpack.c.l.b16 %v266
        %v323 = vunpack.c.l.b16 %v267
        %v324 = vunpack.c.l.b16 %v268
        %v325 = vunpack.c.l.b16 %v269
        %v326 = vunpack.c.l.b16 %v270
        %v327 = vunpack.c.l.b16 %v271
        %v328 = vpack.c.b16 %v313, %v312
        %v329 = vpack.c.b16 %v315, %v314
        %v330 = vpack.c.b16 %v317, %v316
        %v331 = vpack.c.b16 %v319, %v318
        %v332 = vpack.c.b16 %v321, %v320
        %v333 = vpack.c.b16 %v323, %v322
        %v334 = vpack.c.b16 %v325, %v324
        %v335 = vpack.c.b16 %v327, %v326
        %344 = vmatprep.subr.bf16.mxu0 0
        %345 = vmatpush1.bf16.msra.mxu0 %v335
        %346 = vmatprep.subr.bf16.mxu0 0
        %347 = vmatpush1.bf16.msra.mxu0 %v334
        %348 = vmatprep.subr.bf16.mxu0 0
        %349 = vmatpush1.bf16.msra.mxu0 %v333
        %350 = vmatprep.subr.bf16.mxu0 0
        %351 = vmatpush1.bf16.msra.mxu0 %v332
        %352 = vmatprep.subr.bf16.mxu0 0
        %353 = vmatpush1.bf16.msra.mxu0 %v331
        %354 = vmatprep.subr.bf16.mxu0 0
        %355 = vmatpush1.bf16.msra.mxu0 %v330
        %356 = vmatprep.subr.bf16.mxu0 0
        %357 = vmatpush1.bf16.msra.mxu0 %v329
        %358 = vmatprep.subr.bf16.mxu0 0
        %359 = vmatpush1.bf16.msra.mxu0 %v328
        %360 = vmatprep.subr.bf16.mxu0 0
        %361 = vmatpush2.bf16.msra.mxu0 0
        %362 = vmatprep.subr.bf16.mxu0 0
        %363 = vmatpush2.bf16.msra.mxu0 0
        %364 = vmatprep.subr.bf16.mxu0 0
        %365 = vmatpush2.bf16.msra.mxu0 0
        %366 = vmatprep.subr.bf16.mxu0 0
        %367 = vmatpush2.bf16.msra.mxu0 0
        %368 = vmatprep.subr.bf16.mxu0 0
        %369 = vmatpush2.bf16.msra.mxu0 0
        %370 = vmatprep.subr.bf16.mxu0 0
        %371 = vmatpush2.bf16.msra.mxu0 0
        %372 = vmatprep.subr.bf16.mxu0 0
        %373 = vmatpush2.bf16.msra.mxu0 0
        %374 = vmatprep.subr.bf16.mxu0 0
        %375 = vmatpush2.bf16.msra.mxu0 0
        %376 = vmatprep.mubr.bf16.mxu0 0
        %377 = vmatmul.mubr.bf16.gmra.mxu0 %v288
        %v378 = vpop.f32.mrf.mxu0
        %v379 = vadd.f32 0.0, %v378
        %v380 = vpop.f32.mrf.mxu0
        %v381 = vpop.f32.mrf.mxu0
        %v382 = vadd.f32 0.0, %v381
        %v383 = vpop.f32.mrf.mxu0
        %384 = vmatprep.mubr.bf16.mxu0 0
        %385 = vmatmul.mubr.bf16.gmra.mxu0 %v289
        %v386 = vpop.f32.mrf.mxu0
        %v387 = vadd.f32 0.0, %v386
        %v388 = vpop.f32.mrf.mxu0
        %v389 = vpop.f32.mrf.mxu0
        %v390 = vadd.f32 0.0, %v389
        %v391 = vpop.f32.mrf.mxu0
        %392 = vmatprep.mubr.bf16.mxu0 0
        %393 = vmatmul.mubr.bf16.gmra.mxu0 %v290
        %v394 = vpop.f32.mrf.mxu0
        %v395 = vadd.f32 0.0, %v394
        %v396 = vpop.f32.mrf.mxu0
        %v397 = vpop.f32.mrf.mxu0
        %v398 = vadd.f32 0.0, %v397
        %v399 = vpop.f32.mrf.mxu0
        %400 = vmatprep.mubr.bf16.mxu0 0
        %401 = vmatmul.mubr.bf16.gmra.mxu0 %v291
        %v402 = vpop.f32.mrf.mxu0
        %v403 = vadd.f32 0.0, %v402
        %v404 = vpop.f32.mrf.mxu0
        %v405 = vpop.f32.mrf.mxu0
        %v406 = vadd.f32 0.0, %v405
        %v407 = vpop.f32.mrf.mxu0
        %408 = vdwg.mxu0
        %s409 = smul.u32 %s22, 64
        %s410 = sshra.s32 %s409, 3
        %s411 = sand.u32 %s409, 7
        %s412 = smul.addr %s410, 4
        %s413 = scalar_lea.vmem [#allocation5], %s412
        %v414 = vld [vmem:[%s413] sm:$0xf]
        %v415 = vld [vmem:[%s413 + $0x4] sm:$0xf]
        %v416 = vld [vmem:[%s413 + $0x8] sm:$0xf]
        %v417 = vld [vmem:[%s413 + $0xc] sm:$0xf]
        %v418 = vld [vmem:[%s413 + $0x10] sm:$0xf]
        %v419 = vld [vmem:[%s413 + $0x14] sm:$0xf]
        %v420 = vld [vmem:[%s413 + $0x18] sm:$0xf]
        %v421 = vld [vmem:[%s413 + $0x1c] sm:$0xf]
        %v422 = vpack.c.bf16 %v382, %v379
        %v423 = vpack.c.bf16 %v390, %v387
        %v424 = vpack.c.bf16 %v398, %v395
        %v425 = vpack.c.bf16 %v406, %v403
        %v434 = vunpack.c.l.b16 %v414
        %v435 = vunpack.c.l.b16 %v415
        %v436 = vunpack.c.l.b16 %v416
        %v437 = vunpack.c.l.b16 %v417
        %v438 = vunpack.c.l.b16 %v418
        %v439 = vunpack.c.l.b16 %v419
        %v440 = vunpack.c.l.b16 %v420
        %v441 = vunpack.c.l.b16 %v421
        %v442 = vpack.c.b16 %v435, %v434
        %v443 = vpack.c.b16 %v437, %v436
        %v444 = vpack.c.b16 %v439, %v438
        %v445 = vpack.c.b16 %v441, %v440
        %v450 = vld [vmem:[#allocation7] sm:$0xf]
        %v451 = vld [vmem:[#allocation7 + $0x4] sm:$0xf]
        %v452 = vld [vmem:[#allocation7 + $0x8] sm:$0xf]
        %v453 = vld [vmem:[#allocation7 + $0xc] sm:$0xf]
        %v454 = vld [vmem:[#allocation7 + $0x10] sm:$0xf]
        %v455 = vld [vmem:[#allocation7 + $0x14] sm:$0xf]
        %v456 = vld [vmem:[#allocation7 + $0x18] sm:$0xf]
        %v457 = vld [vmem:[#allocation7 + $0x1c] sm:$0xf]
        %v458 = vld [vmem:[#allocation7 + $0x20] sm:$0xf]
        %v459 = vld [vmem:[#allocation7 + $0x24] sm:$0xf]
        %v460 = vld [vmem:[#allocation7 + $0x28] sm:$0xf]
        %v461 = vld [vmem:[#allocation7 + $0x2c] sm:$0xf]
        %v462 = vld [vmem:[#allocation7 + $0x30] sm:$0xf]
        %v463 = vld [vmem:[#allocation7 + $0x34] sm:$0xf]
        %v464 = vld [vmem:[#allocation7 + $0x38] sm:$0xf]
        %v465 = vld [vmem:[#allocation7 + $0x3c] sm:$0xf]
        %v466 = vld [vmem:[#allocation7 + $0x40] sm:$0xf]
        %v467 = vld [vmem:[#allocation7 + $0x44] sm:$0xf]
        %v468 = vld [vmem:[#allocation7 + $0x48] sm:$0xf]
        %v469 = vld [vmem:[#allocation7 + $0x4c] sm:$0xf]
        %v470 = vld [vmem:[#allocation7 + $0x50] sm:$0xf]
        %v471 = vld [vmem:[#allocation7 + $0x54] sm:$0xf]
        %v472 = vld [vmem:[#allocation7 + $0x58] sm:$0xf]
        %v473 = vld [vmem:[#allocation7 + $0x5c] sm:$0xf]
        %v474 = vld [vmem:[#allocation7 + $0x60] sm:$0xf]
        %v475 = vld [vmem:[#allocation7 + $0x64] sm:$0xf]
        %v476 = vld [vmem:[#allocation7 + $0x68] sm:$0xf]
        %v477 = vld [vmem:[#allocation7 + $0x6c] sm:$0xf]
        %v478 = vld [vmem:[#allocation7 + $0x70] sm:$0xf]
        %v479 = vld [vmem:[#allocation7 + $0x74] sm:$0xf]
        %v480 = vld [vmem:[#allocation7 + $0x78] sm:$0xf]
        %v481 = vld [vmem:[#allocation7 + $0x7c] sm:$0xf]
        %v482 = vld [vmem:[%s3] sm:$0x1]
        %v484 = vlaneseq
        %v485 = vshrl.u32 %v484, 7
        %v486 = vsub.s32 0, %v485
        %v487 = vrot.slane %v482, %v486
        %v521 = vunpack.c.l.b16 %v450
        %v522 = vunpack.c.l.b16 %v451
        %v523 = vunpack.c.l.b16 %v452
        %v524 = vunpack.c.l.b16 %v453
        %v525 = vunpack.c.l.b16 %v454
        %v526 = vunpack.c.l.b16 %v455
        %v527 = vunpack.c.l.b16 %v456
        %v528 = vunpack.c.l.b16 %v457
        %v529 = vunpack.c.l.b16 %v458
        %v530 = vunpack.c.l.b16 %v459
        %v531 = vunpack.c.l.b16 %v460
        %v532 = vunpack.c.l.b16 %v461
        %v533 = vunpack.c.l.b16 %v462
        %v534 = vunpack.c.l.b16 %v463
        %v535 = vunpack.c.l.b16 %v464
        %v536 = vunpack.c.l.b16 %v465
        %v537 = vunpack.c.l.b16 %v466
        %v538 = vunpack.c.l.b16 %v467
        %v539 = vunpack.c.l.b16 %v468
        %v540 = vunpack.c.l.b16 %v469
        %v541 = vunpack.c.l.b16 %v470
        %v542 = vunpack.c.l.b16 %v471
        %v543 = vunpack.c.l.b16 %v472
        %v544 = vunpack.c.l.b16 %v473
        %v545 = vunpack.c.l.b16 %v474
        %v546 = vunpack.c.l.b16 %v475
        %v547 = vunpack.c.l.b16 %v476
        %v548 = vunpack.c.l.b16 %v477
        %v549 = vunpack.c.l.b16 %v478
        %v550 = vunpack.c.l.b16 %v479
        %v551 = vunpack.c.l.b16 %v480
        %v552 = vunpack.c.l.b16 %v481
        %v553 = vpack.c.b16 %v522, %v521
        %v554 = vpack.c.b16 %v524, %v523
        %v555 = vpack.c.b16 %v526, %v525
        %v556 = vpack.c.b16 %v528, %v527
        %v557 = vpack.c.b16 %v530, %v529
        %v558 = vpack.c.b16 %v532, %v531
        %v559 = vpack.c.b16 %v534, %v533
        %v560 = vpack.c.b16 %v536, %v535
        %v561 = vpack.c.b16 %v538, %v537
        %v562 = vpack.c.b16 %v540, %v539
        %v563 = vpack.c.b16 %v542, %v541
        %v564 = vpack.c.b16 %v544, %v543
        %v565 = vpack.c.b16 %v546, %v545
        %v566 = vpack.c.b16 %v548, %v547
        %v567 = vpack.c.b16 %v550, %v549
        %v568 = vpack.c.b16 %v552, %v551
        %585 = vmatprep.subr.bf16.mxu0 0
        %586 = vmatpush1.bf16.msra.mxu0 %v560
        %587 = vmatprep.subr.bf16.mxu0 0
        %588 = vmatpush1.bf16.msra.mxu0 %v559
        %589 = vmatprep.subr.bf16.mxu0 0
        %590 = vmatpush1.bf16.msra.mxu0 %v558
        %591 = vmatprep.subr.bf16.mxu0 0
        %592 = vmatpush1.bf16.msra.mxu0 %v557
        %593 = vmatprep.subr.bf16.mxu0 0
        %594 = vmatpush1.bf16.msra.mxu0 %v556
        %595 = vmatprep.subr.bf16.mxu0 0
        %596 = vmatpush1.bf16.msra.mxu0 %v555
        %597 = vmatprep.subr.bf16.mxu0 0
        %598 = vmatpush1.bf16.msra.mxu0 %v554
        %599 = vmatprep.subr.bf16.mxu0 0
        %600 = vmatpush1.bf16.msra.mxu0 %v553
        %601 = vmatprep.subr.bf16.mxu0 0
        %602 = vmatpush2.bf16.msra.mxu0 %v568
        %603 = vmatprep.subr.bf16.mxu0 0
        %604 = vmatpush2.bf16.msra.mxu0 %v567
        %605 = vmatprep.subr.bf16.mxu0 0
        %606 = vmatpush2.bf16.msra.mxu0 %v566
        %607 = vmatprep.subr.bf16.mxu0 0
        %608 = vmatpush2.bf16.msra.mxu0 %v565
        %609 = vmatprep.subr.bf16.mxu0 0
        %610 = vmatpush2.bf16.msra.mxu0 %v564
        %611 = vmatprep.subr.bf16.mxu0 0
        %612 = vmatpush2.bf16.msra.mxu0 %v563
        %613 = vmatprep.subr.bf16.mxu0 0
        %614 = vmatpush2.bf16.msra.mxu0 %v562
        %615 = vmatprep.subr.bf16.mxu0 0
        %616 = vmatpush2.bf16.msra.mxu0 %v561
        %617 = vmatprep.mubr.bf16.mxu0 %v442
        %618 = vmatmul.mubr.bf16.gmra.mxu0 %v422
        %v619 = vpop.f32.mrf.mxu0
        %v620 = vadd.f32 %v487, %v619
        %v621 = vpop.f32.mrf.mxu0
        %v622 = vpop.f32.mrf.mxu0
        %v623 = vadd.f32 %v487, %v622
        %v624 = vpop.f32.mrf.mxu0
        %625 = vmatprep.mubr.bf16.mxu0 %v443
        %626 = vmatmul.mubr.bf16.gmra.mxu0 %v423
        %v627 = vpop.f32.mrf.mxu0
        %v628 = vadd.f32 %v487, %v627
        %v629 = vpop.f32.mrf.mxu0
        %v630 = vpop.f32.mrf.mxu0
        %v631 = vadd.f32 %v487, %v630
        %v632 = vpop.f32.mrf.mxu0
        %633 = vmatprep.mubr.bf16.mxu0 %v444
        %634 = vmatmul.mubr.bf16.gmra.mxu0 %v424
        %v635 = vpop.f32.mrf.mxu0
        %v636 = vadd.f32 %v487, %v635
        %v637 = vpop.f32.mrf.mxu0
        %v638 = vpop.f32.mrf.mxu0
        %v639 = vadd.f32 %v487, %v638
        %v640 = vpop.f32.mrf.mxu0
        %641 = vmatprep.mubr.bf16.mxu0 %v445
        %642 = vmatmul.mubr.bf16.gmra.mxu0 %v425
        %v643 = vpop.f32.mrf.mxu0
        %v644 = vadd.f32 %v487, %v643
        %v645 = vpop.f32.mrf.mxu0
        %v646 = vpop.f32.mrf.mxu0
        %v647 = vadd.f32 %v487, %v646
        %v648 = vpop.f32.mrf.mxu0
        %649 = vdwg.mxu0
        %v650 = vmax.f32 %v620, 0.0
        %v651 = vmax.f32 %v623, 0.0
        %v652 = vmax.f32 %v628, 0.0
        %v653 = vmax.f32 %v631, 0.0
        %v654 = vmax.f32 %v636, 0.0
        %v655 = vmax.f32 %v639, 0.0
        %v656 = vmax.f32 %v644, 0.0
        %v657 = vmax.f32 %v647, 0.0
        %v658 = vpack.c.bf16 %v651, %v650
        %v659 = vpack.c.bf16 %v653, %v652
        %v660 = vpack.c.bf16 %v655, %v654
        %v661 = vpack.c.bf16 %v657, %v656
        %v666 = vunpack.c.l.b16 %v658
        %v667 = vunpack.c.h.b16 %v658
        %v668 = vunpack.c.l.b16 %v659
        %v669 = vunpack.c.h.b16 %v659
        %v670 = vunpack.c.l.b16 %v660
        %v671 = vunpack.c.h.b16 %v660
        %v672 = vunpack.c.l.b16 %v661
        %v673 = vunpack.c.h.b16 %v661
        %v674 = vpack.c.b16 %v666, %v666
        %v675 = vpack.c.b16 %v667, %v667
        %v676 = vpack.c.b16 %v668, %v668
        %v677 = vpack.c.b16 %v669, %v669
        %v678 = vpack.c.b16 %v670, %v670
        %v679 = vpack.c.b16 %v671, %v671
        %v680 = vpack.c.b16 %v672, %v672
        %v681 = vpack.c.b16 %v673, %v673
        %690 = vst [vmem:[%s244] sm:$0xf] %v674
        %691 = vst [vmem:[%s244 + $0x4] sm:$0xf] %v675
        %692 = vst [vmem:[%s244 + $0x8] sm:$0xf] %v676
        %693 = vst [vmem:[%s244 + $0xc] sm:$0xf] %v677
        %694 = vst [vmem:[%s244 + $0x10] sm:$0xf] %v678
        %695 = vst [vmem:[%s244 + $0x14] sm:$0xf] %v679
        %696 = vst [vmem:[%s244 + $0x18] sm:$0xf] %v680
        %697 = vst [vmem:[%s244 + $0x1c] sm:$0xf] %v681
        %s698 = sand.u32 %s119, 1
        %s699 = scalar_lea.sflag [#allocation4], %s698
        %s700 = sand.u32 %s119, 1
        %s701 = smul.addr %s700, 32
        %s702 = scalar_lea.vmem [#allocation8], %s701
        // Predicated region
        $region49: #{tpu_custom_call.1} parent=35 // pred_check
          %p703 = pneg %p129
        $region50: #{tpu_custom_call.1} parent=35 // pred_check_branch
          %705 = sbr.rel (%p703) target = $region52
        $region51: #{tpu_custom_call.1} parent=35 // pred_region
          %s706 = smul.u32 8, %s22
          %s708 = ssub.s32 512, 512
          %709 = vsyncadd %s699, %s708
          %s710 = smul.addr %s706, 64
          %s711 = scalar_lea.hbm %s4, %s710
          %s712 = sshll.u32 %s702, 4
          %s713 = int_to_ptr.vmem [resolvable:$true] %s712
          %718 = dma.vmem_to_hbm [thread:$0]  %s713, 512, %s711, %s699, 64, 64, 4
        $region52: #{tpu_custom_call.1} parent=35 // pred_fallthru
          _
      $region36: #{tpu_custom_call.1} parent=5 // pred_fallthru
        _
      %p719 = scmp.le.s32.totalorder 2, %s17
      // Predicated region
      $region53: #{tpu_custom_call.1} parent=5 // pred_check
        %p720 = pneg %p719
      $region54: #{tpu_custom_call.1} parent=5 // pred_check_branch
        %722 = sbr.rel (%p720) target = $region56
      $region55: #{tpu_custom_call.1} parent=5 // pred_region
        %s723 = ssub.s32 %s17, 2
        // Predicated region
        $region57: #{tpu_custom_call.1} parent=55 // pred_check
          %p724 = pneg %p135
        $region58: #{tpu_custom_call.1} parent=55 // pred_check_branch
          %726 = sbr.rel (%p724) target = $region60
        $region59: #{tpu_custom_call.1} parent=55 // pred_region
          %s727 = sand.u32 %s120, 1
          %s728 = scalar_lea.sflag [#allocation4], %s727
          %s729 = sand.u32 %s120, 1
          %s730 = smul.addr %s729, 32
          %s731 = scalar_lea.vmem [#allocation8], %s730
          %732 = dma.done %s728, 512
        $region60: #{tpu_custom_call.1} parent=55 // pred_fallthru
          _
      $region56: #{tpu_custom_call.1} parent=5 // pred_fallthru
        _
    $region6: #{tpu_custom_call.1} parent=1 // loop_footer
      %s21 = sadd.s32 1, %s17
    $region7: #{tpu_custom_call.1} parent=1 // loop_footer_branch
      %16 = sbr.rel target = $region3
    $region8: #{tpu_custom_call.1} parent=1 // loop_exit
      _
    %733 = vsyncpa [#allocation3], 1
    %s734 = scalar_lea.sflag [#allocation3], 1
    %735 = vsyncpa %s734, 1
    %736 = vsyncpa [#allocation6], 1
    %737 = vsyncpa [#allocation4], 1
    %s738 = scalar_lea.sflag [#allocation4], 1
    %739 = vsyncpa %s738, 1

</llo_original>
